<compile_context>
chip_gen: v5e
topology: v5e:2x2
jax: 0.10.0
libtpu: 0.0.40
codegen_flags: <defaults>
</compile_context>

<pallas_src>
import jax
import jax.numpy as jnp
from jax.experimental import pallas as pl
from jax.experimental.pallas import tpu as pltpu


def _swiglu_fg_kernel(e_ref, g_ref, h_ref):
    # f32 SiLU -> cast to g dtype -> multiply; same rounding order as the
    # Triton kernel.  tanh form = single EUP op per element.
    e32 = e_ref[...].astype(jnp.float32)
    sig = 0.5 * (jnp.tanh(0.5 * e32) + 1.0)
    f = (e32 * sig).astype(g_ref.dtype)
    h_ref[...] = (f * g_ref[...]).astype(h_ref.dtype)


def _sublane_multiple(dtype) -> int:
    # f32 -> 8, bf16 -> 16, int8/fp8 -> 32 (sub-32-bit packs along sublanes).
    itemsize = jnp.dtype(dtype).itemsize
    return 8 * max(1, 4 // itemsize)


def _round_up(x: int, m: int) -> int:
    return ((x + m - 1) // m) * m


def _vmem_phys_bytes() -> int:
    # Physical VMEM per TensorCore; conservative fallback = v7x's 64 MiB.
    try:
        return int(pltpu.get_tpu_info().vmem_capacity_bytes)
    except Exception:
        return 64 * 1024 * 1024


def swiglu_fg(e, g, *, target_block_bytes=4 * 1024 * 1024, max_col_tile=4096):
    """SwiGLU forward: h = silu(e) * g, output dtype = e.dtype.

    Accepts (..., hidden); leading dims are flattened into rows (free
    leading-dim merge, no data movement). No padding / slicing copies.
    """
    assert e.shape == g.shape, "e and g must have identical shapes"
    assert e.dtype == g.dtype, "e and g must have identical dtypes (sizing uses e.dtype)"

    orig_shape = e.shape
    hd = orig_shape[-1]
    rows = 1
    for d in orig_shape[:-1]:
        rows *= d
    rows = max(rows, 1)

    e2 = e.reshape(rows, hd)          # leading-dim merge: layout-preserving
    g2 = g.reshape(rows, hd)

    itemsize = jnp.dtype(e.dtype).itemsize
    sub = _sublane_multiple(e.dtype)

    # ---- lane (last-dim) tile ------------------------------------------------
    # Full hd when it fits (lane-dense, no partial column blocks); otherwise a
    # wide 128-multiple tile with a Pallas-masked partial trailing block.
    # TODO(synk): hd < 128 still produces masked narrow stores; avoiding that
    # would need a physical re-layout (HBM copy), which costs more than it saves.
    col_tile = hd if hd <= max_col_tile else max_col_tile
    grid_cols = pl.cdiv(hd, col_tile)

    # ---- sublane (row) tile: ~target_block_bytes per input block ------------
    def _row_tile_for(block_bytes: int) -> int:
        rt = max(sub, block_bytes // max(1, col_tile * itemsize))
        rt = (rt // sub) * sub
        if rt >= rows:
            return rows               # full extent: always a legal block dim
        return max(sub, rt)

    # VMEM footprint per element of a block: 2x double-buffered (2 in + 1 out)
    # native-dtype buffers + ~2 live f32 temporaries.
    phys = _vmem_phys_bytes()
    vmem_budget = int(phys * 0.8)

    def _estimate(rt: int) -> int:
        blk = _round_up(rt, sub) * _round_up(col_tile, 128)
        return blk * (2 * 3 * itemsize + 8)

    tb = target_block_bytes
    row_tile = _row_tile_for(tb)
    while _estimate(row_tile) > vmem_budget and row_tile > sub and tb > 128 * 1024:
        tb //= 2
        row_tile = _row_tile_for(tb)

    grid_rows = pl.cdiv(rows, row_tile)

    # v7x has 2 TensorCores: make sure the parallel grid has >= 2 steps
    # whenever there is enough work to split.
    if grid_rows * grid_cols < 2 and rows >= 2 * sub:
        row_tile = max(sub, _round_up(pl.cdiv(rows, 2), sub))
        if row_tile >= rows:
            row_tile = rows
        grid_rows = pl.cdiv(rows, row_tile)

    spec = pl.BlockSpec((row_tile, col_tile), lambda i, j: (i, j))

    vmem_limit = int(min(int(phys * 0.85),
                         max(32 * 1024 * 1024, int(_estimate(row_tile) * 1.2))))

    h2 = pl.pallas_call(
        _swiglu_fg_kernel,
        out_shape=jax.ShapeDtypeStruct((rows, hd), e.dtype),
        grid_spec=pltpu.PrefetchScalarGridSpec(
            num_scalar_prefetch=0,
            grid=(grid_rows, grid_cols),
            in_specs=[spec, spec],
            out_specs=spec,
        ),
        compiler_params=pltpu.CompilerParams(
            dimension_semantics=("parallel", "parallel"),
            vmem_limit_bytes=vmem_limit,
        ),
        # TODO(synk): add input_output_aliases={0: 0} (write h into e's buffer)
        # if the unsloth call site never reuses e after the forward call.
    )(e2, g2)

    return h2.reshape(orig_shape)


def _reference(e, g):
    e32 = e.astype(jnp.float32)
    f = (e32 * jax.nn.sigmoid(e32)).astype(g.dtype)
    return (f * g).astype(e.dtype)


if __name__ == "__main__":
    key = jax.random.PRNGKey(0)
    k1, k2, k3, k4, k5, k6 = jax.random.split(key, 6)

    def check(e, g):
        h = swiglu_fg(e, g)
        jax.block_until_ready(h)
        h_ref = _reference(e, g)
        assert h.shape == e.shape
        assert h.dtype == e.dtype
        assert jnp.allclose(h.astype(jnp.float32), h_ref.astype(jnp.float32),
                            atol=1e-2, rtol=1e-2)

    # (batch, seq_len, hidden) layout, as in DistributedSwiGLU.forward.
    e1 = jax.random.normal(k1, (2, 8, 32), dtype=jnp.bfloat16)
    g1 = jax.random.normal(k2, (2, 8, 32), dtype=jnp.bfloat16)
    check(e1, g1)

    # rows = 600 (not tile-divisible): exercises the partial row block path
    # (no wrapper-side padding / slicing).
    e2 = jax.random.normal(k3, (2, 300, 1536), dtype=jnp.bfloat16)
    g2 = jax.random.normal(k4, (2, 300, 1536), dtype=jnp.bfloat16)
    check(e2, g2)

    # f32 inputs, hidden > max_col_tile: exercises the partial lane block and
    # the f32 sublane-multiple path.
    e3 = jax.random.normal(k5, (1, 17, 4224), dtype=jnp.float32)
    g3 = jax.random.normal(k6, (1, 17, 4224), dtype=jnp.float32)
    check(e3, g3)

    print("KERNEL_OK")
</pallas_src>

<mosaic_0001>
module attributes {stable_mosaic.version = 11 : i64} {
  func.func @_swiglu_fg_kernel(%arg0: i32, %arg1: i32, %arg2: memref<16x32xbf16, #tpu.memory_space<vmem>>, %arg3: memref<16x32xbf16, #tpu.memory_space<vmem>>, %arg4: memref<16x32xbf16, #tpu.memory_space<vmem>>) attributes {dimension_semantics = [#tpu.dimension_semantics<parallel>, #tpu.dimension_semantics<parallel>], iteration_bounds = array<i64: 1, 1>, scalar_prefetch = 0 : i64, scratch_operands = 0 : i64, tpu.core_type = #tpu.core_type<tc>, window_params = [{transform_indices = @transform_0, window_bounds = array<i64: 16, 32>}, {transform_indices = @transform_1, window_bounds = array<i64: 16, 32>}, {transform_indices = @transform_2, window_bounds = array<i64: 16, 32>}]} {
    %c0 = arith.constant 0 : index
    %c0_0 = arith.constant 0 : index
    %0 = vector.load %arg2[%c0, %c0_0] : memref<16x32xbf16, #tpu.memory_space<vmem>>, vector<16x32xbf16>
    %1 = arith.extf %0 : vector<16x32xbf16> to vector<16x32xf32>
    %cst = arith.constant 5.000000e-01 : f32
    %2 = vector.broadcast %cst : f32 to vector<16x32xf32>
    %3 = arith.mulf %2, %1 : vector<16x32xf32>
    %4 = math.tanh %3 : vector<16x32xf32>
    %cst_1 = arith.constant 1.000000e+00 : f32
    %5 = vector.broadcast %cst_1 : f32 to vector<16x32xf32>
    %6 = arith.addf %4, %5 : vector<16x32xf32>
    %cst_2 = arith.constant 5.000000e-01 : f32
    %7 = vector.broadcast %cst_2 : f32 to vector<16x32xf32>
    %8 = arith.mulf %7, %6 : vector<16x32xf32>
    %9 = arith.mulf %1, %8 : vector<16x32xf32>
    %10 = arith.truncf %9 : vector<16x32xf32> to vector<16x32xbf16>
    %c0_3 = arith.constant 0 : index
    %c0_4 = arith.constant 0 : index
    %11 = vector.load %arg3[%c0_3, %c0_4] : memref<16x32xbf16, #tpu.memory_space<vmem>>, vector<16x32xbf16>
    %12 = arith.mulf %10, %11 : vector<16x32xbf16>
    %c0_5 = arith.constant 0 : index
    %c0_6 = arith.constant 0 : index
    %13 = vector.load %arg4[%c0_5, %c0_6] : memref<16x32xbf16, #tpu.memory_space<vmem>>, vector<16x32xbf16>
    tpu.vector_store %arg4[%c0_5, %c0_6], %12 {strides = array<i32>} : memref<16x32xbf16, #tpu.memory_space<vmem>>, vector<16x32xbf16>,
    return
  }
  func.func @transform_0(%arg0: i32, %arg1: i32) -> (i32, i32) {
    %c0_i32 = arith.constant 0 : i32
    return %arg0, %arg1 : i32, i32
  }
  func.func @transform_1(%arg0: i32, %arg1: i32) -> (i32, i32) {
    %c0_i32 = arith.constant 0 : i32
    return %arg0, %arg1 : i32, i32
  }
  func.func @transform_2(%arg0: i32, %arg1: i32) -> (i32, i32) {
    %c0_i32 = arith.constant 0 : i32
    return %arg0, %arg1 : i32, i32
  }
}

</mosaic_0001>

<llo_original>
// kernel: tpu_custom_call.1
$region0: #{tpu_custom_call.1}
  #allocation0 [shape = 'u32[]', space=smem, size = 0x4, offset = 0x4, fixed_abs, tag = 'smem constant byte address 0x4 - core index']
  #allocation1 [shape = 'u32[72,128]{1,0:T(1,128)}', space=vmem, size = 0x9000, scoped, tag = 'internal scratch']
  %s0 = inlined_call_operand.hbm [shape: bf16[16,32], index: 0, kind: input, shape index: {}]
  %s1 = inlined_call_operand.hbm [shape: bf16[16,32], index: 1, kind: input, shape index: {}]
  %s2 = inlined_call_operand.hbm [shape: bf16[16,32], index: 2, kind: output, shape index: {}]
  %s3 = sld [smem:[#allocation0]]
  $region26: #{tpu_custom_call.1} parent=0
    _
  %s5 = ssub.s32 1, %s3
  %s6 = scalar_select 0, %s5, %s3
  $region1: #{tpu_custom_call.1} parent=0
    #allocation2 [shape = 'u8[4096]{0}', space=vmem, size = 0x1000, scoped, tag = 'input window, operand 0, single buffered']
    #allocation3 [shape = 's32[1]{0}', space=sflag, size = 0x4, scoped, tag = 'scoped memory for tpu_custom_call.1']
    #allocation4 [shape = 's32[1]{0}', space=sflag, size = 0x4, scoped, tag = 'scoped memory for tpu_custom_call.1']
    #allocation5 [shape = 'u8[4096]{0}', space=vmem, size = 0x1000, scoped, tag = 'input window, operand 1, single buffered']
    #allocation6 [shape = 's32[1]{0}', space=sflag, size = 0x4, scoped, tag = 'scoped memory for tpu_custom_call.1']
    #allocation7 [shape = 'u8[4096]{0}', space=vmem, size = 0x1000, scoped, tag = 'output window, operand 0, single buffered']
    %7 = vsyncpa [#allocation3], 0
    %8 = vsyncpa [#allocation6], 0
    %9 = vsyncpa [#allocation4], 0
    // Predicated region
    $region2: #{tpu_custom_call.1} parent=1 // pred_check
      _
    $region3: #{tpu_custom_call.1} parent=1 // pred_check_branch
      %11 = sbr.rel (0) target = $region5
    $region4: #{tpu_custom_call.1} parent=1 // pred_region
      %13 = vsyncadd [#allocation3], 0
      %s14 = sshll.u32 %s0, 4
      %s15 = int_to_ptr.hbm [resolvable:$true] %s14
      %s16 = sshll.u32 [#allocation2], 4
      %s17 = int_to_ptr.vmem [resolvable:$true] %s16
      %22 = dma.hbm_to_vmem [thread:$0]  %s15, 128, %s17, [#allocation3], 64, 64, 4
    $region5: #{tpu_custom_call.1} parent=1 // pred_fallthru
      _
    // Predicated region
    $region6: #{tpu_custom_call.1} parent=1 // pred_check
      _
    $region7: #{tpu_custom_call.1} parent=1 // pred_check_branch
      %24 = sbr.rel (0) target = $region9
    $region8: #{tpu_custom_call.1} parent=1 // pred_region
      %26 = vsyncadd [#allocation6], 0
      %s27 = sshll.u32 %s1, 4
      %s28 = int_to_ptr.hbm [resolvable:$true] %s27
      %s29 = sshll.u32 [#allocation5], 4
      %s30 = int_to_ptr.vmem [resolvable:$true] %s29
      %35 = dma.hbm_to_vmem [thread:$0]  %s28, 128, %s30, [#allocation6], 64, 64, 4
    $region9: #{tpu_custom_call.1} parent=1 // pred_fallthru
      _
    // Predicated region
    $region10: #{tpu_custom_call.1} parent=1 // pred_check
      _
    $region11: #{tpu_custom_call.1} parent=1 // pred_check_branch
      %37 = sbr.rel (0) target = $region13
    $region12: #{tpu_custom_call.1} parent=1 // pred_region
      %39 = dma.done [#allocation3], 128
    $region13: #{tpu_custom_call.1} parent=1 // pred_fallthru
      _
    // Predicated region
    $region14: #{tpu_custom_call.1} parent=1 // pred_check
      _
    $region15: #{tpu_custom_call.1} parent=1 // pred_check_branch
      %41 = sbr.rel (0) target = $region17
    $region16: #{tpu_custom_call.1} parent=1 // pred_region
      %43 = dma.done [#allocation6], 128
    $region17: #{tpu_custom_call.1} parent=1 // pred_fallthru
      _
    %v44 = vld [vmem:[#allocation2] sm:$0xf]
    %v45 = vld [vmem:[#allocation2 + $0x4] sm:$0xf]
    %v46 = vunpack.c.l.bf16 %v44
    %v47 = vunpack.c.l.bf16 %v45
    %v48 = vmul.f32 %v46, 0.5
    %v49 = vmul.f32 %v47, 0.5
    %v50 = vtanh.pop %v48
    %v51 = vtanh.pop %v49
    %v52 = vadd.f32 %v50, 1.0
    %v53 = vadd.f32 %v51, 1.0
    %v54 = vmul.f32 %v52, 0.5
    %v55 = vmul.f32 %v53, 0.5
    %v56 = vmul.f32 %v46, %v54
    %v57 = vmul.f32 %v47, %v55
    %v58 = vpack.c.bf16 %v56, %v56
    %v59 = vpack.c.bf16 %v57, %v57
    %v60 = vld [vmem:[#allocation5] sm:$0xf]
    %v61 = vld [vmem:[#allocation5 + $0x4] sm:$0xf]
    %v62 = vunpack.c.l.bf16 %v58
    %v63 = vunpack.c.l.bf16 %v59
    %v64 = vunpack.c.l.bf16 %v60
    %v65 = vunpack.c.l.bf16 %v61
    %v66 = vmul.f32 %v62, %v64
    %v67 = vmul.f32 %v63, %v65
    %v68 = vpack.c.bf16 %v66, %v66
    %v69 = vpack.c.bf16 %v67, %v67
    %vm70 = vcmask 257024
    %71 = vst.msk [vmem:[#allocation7] sm:$0xf] %vm70, %v68
    %72 = vst.msk [vmem:[#allocation7 + $0x4] sm:$0xf] %vm70, %v69
    // Predicated region
    $region18: #{tpu_custom_call.1} parent=1 // pred_check
      _
    $region19: #{tpu_custom_call.1} parent=1 // pred_check_branch
      %74 = sbr.rel (0) target = $region21
    $region20: #{tpu_custom_call.1} parent=1 // pred_region
      %76 = vsyncadd [#allocation4], 0
      %s77 = sshll.u32 [#allocation7], 4
      %s78 = int_to_ptr.vmem [resolvable:$true] %s77
      %s79 = sshll.u32 %s2, 4
      %s80 = int_to_ptr.hbm [resolvable:$true] %s79
      %85 = dma.vmem_to_hbm [thread:$0]  %s78, 128, %s80, [#allocation4], 64, 64, 4
    $region21: #{tpu_custom_call.1} parent=1 // pred_fallthru
      _
    // Predicated region
    $region22: #{tpu_custom_call.1} parent=1 // pred_check
      _
    $region23: #{tpu_custom_call.1} parent=1 // pred_check_branch
      %87 = sbr.rel (0) target = $region25
    $region24: #{tpu_custom_call.1} parent=1 // pred_region
      %89 = dma.done [#allocation4], 128
    $region25: #{tpu_custom_call.1} parent=1 // pred_fallthru
      _
    %90 = vsyncpa [#allocation3], 1
    %91 = vsyncpa [#allocation6], 1
    %92 = vsyncpa [#allocation4], 1

</llo_original>
